<compile_context>
chip_gen: v7x
topology: tpu7x:2x2x1
jax: 0.10.0
libtpu: 0.0.40
codegen_flags: <defaults>
</compile_context>

<pallas_src>
import jax
import jax.numpy as jnp
from jax import lax
from jax.experimental import pallas as pl
from jax.experimental.pallas import tpu as pltpu


def _convhead_kernel(p_ref, w3_ref, b3_ref, w1_ref, b1_ref, o_ref):
    # p_ref:  (1, 9*Cin, T)  bf16  im2col patches, channels-first, lane = spatial
    # w3_ref: (Cin, 9*Cin)   bf16  3x3 conv weights, contraction order (dy, dx, cin)
    # b3_ref: (Cin, 1)       f32   3x3 conv bias
    # w1_ref: (Cout, Cin)    bf16  1x1 conv weights with BN scale folded in
    # b1_ref: (Cout, 1)      f32   1x1 conv bias with BN shift folded in
    # o_ref:  (1, Cout, T)   f32   channels-first output tile (lane-dense)
    # 3x3 conv as a single MXU matmul with K = 9*Cin.
    z = jnp.dot(w3_ref[...], p_ref[0], preferred_element_type=jnp.float32)
    # Bias + ReLU in f32 (the BN affine is already folded into w1/b1).
    z = jnp.maximum(z + b3_ref[...], 0.0)
    # 1x1 conv (+ folded BN): (Cout, Cin) x (Cin, T) on the MXU.
    out = jnp.dot(w1_ref[...], z.astype(w1_ref.dtype),
                  preferred_element_type=jnp.float32)
    o_ref[0] = (out + b1_ref[...]).astype(o_ref.dtype)


def _pick_lane_tile(hw):
    # Lane tile: a multiple of 128 that divides H*W, preferring >= 2 tiles per
    # image so both TensorCores get pipelined work.
    for t in (2048, 1024, 512, 256, 128):
        if hw % t == 0 and hw // t >= 2:
            return t
    if hw % 128 == 0:
        return 128
    return hw  # fall back to a single full-extent block


def conv_head_pallas(x_nchw, params):
    """x_nchw: (B, Cin, H, W) float32. Returns (B, Cout, H, W) float32."""
    w3, b3, gamma, beta, run_mean, run_var, w1, b1 = (
        params["w3"], params["b3"], params["gamma"], params["beta"],
        params["run_mean"], params["run_var"], params["w1"], params["b1"])

    B, Cin, H, W = x_nchw.shape
    Cout = w1.shape[0]
    HW = H * W
    K = 9 * Cin
    eps = 1e-5

    # ---- glue (plain JAX): channels-first im2col + parameter folding ----
    # patches[b, (dy*3+dx)*Cin + cin, h*W + w] = x_pad[b, cin, h+dy, w+dx]
    x_pad = jnp.pad(x_nchw, ((0, 0), (0, 0), (1, 1), (1, 1)))
    taps = [x_pad[:, :, dy:dy + H, dx:dx + W]
            for dy in range(3) for dx in range(3)]
    patches = jnp.stack(taps, axis=1).reshape(B, K, HW).astype(jnp.bfloat16)

    # PyTorch 3x3 weight (Cout3=Cin, Cin, 3, 3) -> (Cin, (dy, dx, cin)).
    w3_cf = jnp.transpose(w3, (0, 2, 3, 1)).reshape(Cin, K).astype(jnp.bfloat16)
    b3_r = b3.reshape(Cin, 1).astype(jnp.float32)

    # Fold eval-mode BatchNorm into the 1x1 conv (BN affine, 1x1 linear).
    bn_scale = gamma / jnp.sqrt(run_var + eps)
    bn_shift = beta - run_mean * bn_scale
    w1_m = w1.reshape(Cout, Cin)
    w1_eff = (w1_m * bn_scale[None, :]).astype(jnp.bfloat16)
    b1_eff = (w1_m @ bn_shift + b1).reshape(Cout, 1).astype(jnp.float32)

    T = _pick_lane_tile(HW)
    n_t = HW // T

    cost = pl.CostEstimate(
        flops=2 * B * HW * (K * Cin + Cin * Cout),
        transcendentals=0,
        bytes_accessed=(patches.size * 2 + w3_cf.size * 2 + w1_eff.size * 2
                        + (b3_r.size + b1_eff.size) * 4 + B * Cout * HW * 4),
    )

    out_cf = pl.pallas_call(
        _convhead_kernel,
        out_shape=jax.ShapeDtypeStruct((B, Cout, HW), jnp.float32),
        grid_spec=pltpu.PrefetchScalarGridSpec(
            num_scalar_prefetch=0,
            grid=(B, n_t),
            in_specs=[
                pl.BlockSpec((1, K, T), lambda b, t: (b, 0, t)),
                pl.BlockSpec((Cin, K), lambda b, t: (0, 0)),
                pl.BlockSpec((Cin, 1), lambda b, t: (0, 0)),
                pl.BlockSpec((Cout, Cin), lambda b, t: (0, 0)),
                pl.BlockSpec((Cout, 1), lambda b, t: (0, 0)),
            ],
            out_specs=pl.BlockSpec((1, Cout, T), lambda b, t: (b, 0, t)),
        ),
        compiler_params=pltpu.CompilerParams(
            dimension_semantics=("parallel", "parallel")),
        cost_estimate=cost,
    )(patches, w3_cf, b3_r, w1_eff, b1_eff)

    # Channels-first kernel output (B, Cout, H*W) -> NCHW is a pure reshape.
    return out_cf.reshape(B, Cout, H, W)


def conv_head_reference(x_nchw, params):
    """Pure-JAX f32 reference (NHWC convs) for correctness checking."""
    w3, b3, gamma, beta, run_mean, run_var, w1, b1 = (
        params["w3"], params["b3"], params["gamma"], params["beta"],
        params["run_mean"], params["run_var"], params["w1"], params["b1"])
    eps = 1e-5
    x = jnp.transpose(x_nchw, (0, 2, 3, 1))
    dn = ("NHWC", "HWIO", "NHWC")
    y = lax.conv_general_dilated(x, jnp.transpose(w3, (2, 3, 1, 0)),
                                 window_strides=(1, 1), padding="SAME",
                                 dimension_numbers=dn)
    y = y + b3[None, None, None, :]
    y = jnp.maximum(y, 0.0)
    y = (y - run_mean) / jnp.sqrt(run_var + eps) * gamma + beta
    y = lax.conv_general_dilated(y, jnp.transpose(w1, (2, 3, 1, 0)),
                                 window_strides=(1, 1), padding="VALID",
                                 dimension_numbers=dn)
    y = y + b1[None, None, None, :]
    return jnp.transpose(y, (0, 3, 1, 2))


def make_params(key, in_channels, out_channels):
    ks = jax.random.split(key, 8)
    return {
        "w3": jax.random.normal(ks[0], (in_channels, in_channels, 3, 3),
                                jnp.float32) * 0.05,
        "b3": jax.random.normal(ks[1], (in_channels,), jnp.float32) * 0.05,
        "gamma": 1.0 + 0.1 * jax.random.normal(ks[2], (in_channels,), jnp.float32),
        "beta": 0.1 * jax.random.normal(ks[3], (in_channels,), jnp.float32),
        "run_mean": 0.1 * jax.random.normal(ks[4], (in_channels,), jnp.float32),
        "run_var": 1.0 + 0.1 * jax.random.uniform(ks[5], (in_channels,), jnp.float32),
        "w1": jax.random.normal(ks[6], (out_channels, in_channels, 1, 1),
                                jnp.float32) * 0.05,
        "b1": jax.random.normal(ks[7], (out_channels,), jnp.float32) * 0.05,
    }


if __name__ == "__main__":
    key = jax.random.PRNGKey(0)
    k_x, k_p = jax.random.split(key)

    B, Cin, H, W = 2, 32, 16, 16   # in_channels=32 (module default)
    Cout = 4

    x = jax.random.normal(k_x, (B, Cin, H, W), jnp.float32)
    params = make_params(k_p, Cin, Cout)

    out = jax.block_until_ready(conv_head_pallas(x, params))

    ref = conv_head_reference(x, params)
    assert out.shape == (B, Cout, H, W)
    err = float(jnp.max(jnp.abs(out - ref)))
    # bf16 MXU operands (f32 accumulation) -> loose absolute tolerance.
    assert err < 5e-2, f"mismatch vs reference: max|diff|={err}"

    print("KERNEL_OK")
</pallas_src>

<mosaic_0001>
module attributes {stable_mosaic.version = 11 : i64} {
  func.func @_convhead_kernel(%arg0: i32, %arg1: i32, %arg2: memref<1x288x128xbf16, #tpu.memory_space<vmem>>, %arg3: memref<32x288xbf16, #tpu.memory_space<vmem>>, %arg4: memref<32x1xf32, #tpu.memory_space<vmem>>, %arg5: memref<4x32xbf16, #tpu.memory_space<vmem>>, %arg6: memref<4x1xf32, #tpu.memory_space<vmem>>, %arg7: memref<1x4x128xf32, #tpu.memory_space<vmem>>) attributes {dimension_semantics = [#tpu.dimension_semantics<parallel>, #tpu.dimension_semantics<parallel>], iteration_bounds = array<i64: 2, 2>, scalar_prefetch = 0 : i64, scratch_operands = 0 : i64, tpu.core_type = #tpu.core_type<tc>, window_params = [{transform_indices = @transform_0, window_bounds = array<i64: 1, 288, 128>}, {pipeline_mode = #tpu.pipeline_mode<synchronous>, transform_indices = @transform_1, window_bounds = array<i64: 32, 288>}, {pipeline_mode = #tpu.pipeline_mode<synchronous>, transform_indices = @transform_2, window_bounds = array<i64: 32, 1>}, {pipeline_mode = #tpu.pipeline_mode<synchronous>, transform_indices = @transform_3, window_bounds = array<i64: 4, 32>}, {pipeline_mode = #tpu.pipeline_mode<synchronous>, transform_indices = @transform_4, window_bounds = array<i64: 4, 1>}, {transform_indices = @transform_5, window_bounds = array<i64: 1, 4, 128>}]} {
    %c0 = arith.constant 0 : index
    %c0_0 = arith.constant 0 : index
    %0 = vector.load %arg3[%c0, %c0_0] : memref<32x288xbf16, #tpu.memory_space<vmem>>, vector<32x288xbf16>
    %c0_1 = arith.constant 0 : index
    %c0_2 = arith.constant 0 : index
    %c0_3 = arith.constant 0 : index
    %1 = vector.load %arg2[%c0_1, %c0_2, %c0_3] : memref<1x288x128xbf16, #tpu.memory_space<vmem>>, vector<1x288x128xbf16>
    %2 = vector.shape_cast %1 : vector<1x288x128xbf16> to vector<288x128xbf16>
    %cst = arith.constant dense<0.000000e+00> : vector<32x128xf32>
    %3 = tpu.matmul %0, %2, %cst {dimension_numbers = #tpu.dot_dimension_numbers<[1], [0], [0], [1], [0, 0, 1, 1], [], []>} : vector<32x288xbf16>, vector<288x128xbf16>, vector<32x128xf32> -> vector<32x128xf32>
    %c0_4 = arith.constant 0 : index
    %c0_5 = arith.constant 0 : index
    %4 = vector.load %arg4[%c0_4, %c0_5] : memref<32x1xf32, #tpu.memory_space<vmem>>, vector<32x1xf32>
    %5 = vector.broadcast %4 : vector<32x1xf32> to vector<32x128xf32>
    %6 = arith.addf %3, %5 : vector<32x128xf32>
    %cst_6 = arith.constant 0.000000e+00 : f32
    %7 = vector.broadcast %cst_6 : f32 to vector<32x128xf32>
    %8 = arith.maximumf %6, %7 : vector<32x128xf32>
    %c0_7 = arith.constant 0 : index
    %c0_8 = arith.constant 0 : index
    %9 = vector.load %arg5[%c0_7, %c0_8] : memref<4x32xbf16, #tpu.memory_space<vmem>>, vector<4x32xbf16>
    %10 = arith.truncf %8 : vector<32x128xf32> to vector<32x128xbf16>
    %cst_9 = arith.constant dense<0.000000e+00> : vector<4x128xf32>
    %11 = tpu.matmul %9, %10, %cst_9 {dimension_numbers = #tpu.dot_dimension_numbers<[1], [0], [0], [1], [0, 0, 1, 1], [], []>} : vector<4x32xbf16>, vector<32x128xbf16>, vector<4x128xf32> -> vector<4x128xf32>
    %c0_10 = arith.constant 0 : index
    %c0_11 = arith.constant 0 : index
    %12 = vector.load %arg6[%c0_10, %c0_11] : memref<4x1xf32, #tpu.memory_space<vmem>>, vector<4x1xf32>
    %13 = vector.broadcast %12 : vector<4x1xf32> to vector<4x128xf32>
    %14 = arith.addf %11, %13 : vector<4x128xf32>
    %c0_12 = arith.constant 0 : index
    %c0_13 = arith.constant 0 : index
    %c0_14 = arith.constant 0 : index
    %15 = vector.load %arg7[%c0_12, %c0_13, %c0_14] : memref<1x4x128xf32, #tpu.memory_space<vmem>>, vector<1x4x128xf32>
    %16 = vector.shape_cast %15 : vector<1x4x128xf32> to vector<4x128xf32>
    %17 = vector.shape_cast %14 : vector<4x128xf32> to vector<1x4x128xf32>
    tpu.vector_store %arg7[%c0_12, %c0_13, %c0_14], %17 {strides = array<i32>} : memref<1x4x128xf32, #tpu.memory_space<vmem>>, vector<1x4x128xf32>,
    return
  }
  func.func @transform_0(%arg0: i32, %arg1: i32) -> (i32, i32, i32) {
    %c0_i32 = arith.constant 0 : i32
    %c0_i32_0 = arith.constant 0 : i32
    return %arg0, %c0_i32, %arg1 : i32, i32, i32
  }
  func.func @transform_1(%arg0: i32, %arg1: i32) -> (i32, i32) {
    %c0_i32 = arith.constant 0 : i32
    %c0_i32_0 = arith.constant 0 : i32
    %c0_i32_1 = arith.constant 0 : i32
    return %c0_i32, %c0_i32_0 : i32, i32
  }
  func.func @transform_2(%arg0: i32, %arg1: i32) -> (i32, i32) {
    %c0_i32 = arith.constant 0 : i32
    %c0_i32_0 = arith.constant 0 : i32
    %c0_i32_1 = arith.constant 0 : i32
    return %c0_i32, %c0_i32_0 : i32, i32
  }
  func.func @transform_3(%arg0: i32, %arg1: i32) -> (i32, i32) {
    %c0_i32 = arith.constant 0 : i32
    %c0_i32_0 = arith.constant 0 : i32
    %c0_i32_1 = arith.constant 0 : i32
    return %c0_i32, %c0_i32_0 : i32, i32
  }
  func.func @transform_4(%arg0: i32, %arg1: i32) -> (i32, i32) {
    %c0_i32 = arith.constant 0 : i32
    %c0_i32_0 = arith.constant 0 : i32
    %c0_i32_1 = arith.constant 0 : i32
    return %c0_i32, %c0_i32_0 : i32, i32
  }
  func.func @transform_5(%arg0: i32, %arg1: i32) -> (i32, i32, i32) {
    %c0_i32 = arith.constant 0 : i32
    %c0_i32_0 = arith.constant 0 : i32
    return %arg0, %c0_i32, %arg1 : i32, i32, i32
  }
}

</mosaic_0001>

<llo_original>
// kernel: tpu_custom_call.1
$region0: #{tpu_custom_call.1}
  #allocation0 [shape = 'u32[]', space=smem, size = 0x4, offset = 0x4, fixed_abs, tag = 'smem constant byte address 0x4 - core index']
  #allocation1 [shape = 'u32[144,128]{1,0:T(1,128)}', space=vmem, size = 0x12000, scoped, tag = 'internal scratch']
  %s0 = inlined_call_operand.hbm [shape: bf16[2,288,256], index: 0, kind: input, shape index: {}]
  %s1 = inlined_call_operand.hbm [shape: bf16[32,288], index: 1, kind: input, shape index: {}]
  %s2 = inlined_call_operand.vmem [shape: f32[32,1], index: 2, kind: input, shape index: {}]
  %s3 = inlined_call_operand.vmem [shape: bf16[4,32], index: 3, kind: input, shape index: {}]
  %s4 = inlined_call_operand.vmem [shape: f32[4,1], index: 4, kind: input, shape index: {}]
  %s5 = inlined_call_operand.hbm [shape: f32[2,4,256], index: 5, kind: output, shape index: {}]
  %s6 = sld [smem:[#allocation0]]
  $region61: #{tpu_custom_call.1} parent=0
    _
  %s8 = ssub.s32 1, %s6
  %s9 = scalar_select 0, %s8, %s6
  $region1: #{tpu_custom_call.1} parent=0
    #allocation2 [shape = 'u8[147456]{0}', space=vmem, size = 0x24000, scoped, tag = 'input window, operand 0']
    #allocation3 [shape = 's32[2]{0}', space=sflag, size = 0x8, scoped, tag = 'scoped memory for tpu_custom_call.1']
    #allocation4 [shape = 's32[2]{0}', space=sflag, size = 0x8, scoped, tag = 'scoped memory for tpu_custom_call.1']
    #allocation5 [shape = 'u8[24576]{0}', space=vmem, size = 0x6000, scoped, tag = 'input window, operand 1, single buffered']
    #allocation6 [shape = 's32[1]{0}', space=sflag, size = 0x4, scoped, tag = 'scoped memory for tpu_custom_call.1']
    #allocation7 [shape = 'u8[4096]{0}', space=vmem, size = 0x1000, scoped, tag = 'output window, operand 0']
    %10 = vsyncpa [#allocation3], 0
    %s11 = scalar_lea.sflag [#allocation3], 1
    %12 = vsyncpa %s11, 0
    %13 = vsyncpa [#allocation6], 0
    %14 = vsyncpa [#allocation4], 0
    %s15 = scalar_lea.sflag [#allocation4], 1
    %16 = vsyncpa %s15, 0
    loop: start=0, step=1, limit=6
    $region2: #{tpu_custom_call.1} parent=1 // loop_pre_header
      _
    $region3: #{tpu_custom_call.1} parent=1 // loop_header
      %s18 = sphi 0, %s22
      %p19 = scmp.ge.s32.totalorder %s18, 6
      %s25 = sphi 0, %s37
      %s26 = sphi 0, %s33
      %s27 = sphi 0, %s25
      %s28 = sphi 0, %s26
      %s29 = sphi 0, %s27
      %s30 = sphi 0, %s28
      %s42 = sphi 0, %s44
      %s45 = sphi 0, %s42
      %s46 = sphi 0, %s45
      %s62 = sphi 0, %s46
      %s66 = sphi 0, %s66
      %s68 = sphi 0, %s66
      %s69 = sphi 0, %s68
      %s83 = sphi 0, %s69
      %s87 = sphi 0, %s87
      %s89 = sphi 0, %s87
      %s90 = sphi 0, %s89
      %s104 = sphi 0, %s90
      %s108 = sphi 0, %s108
      %s110 = sphi 0, %s108
      %s111 = sphi 0, %s110
      %s125 = sphi 0, %s111
      %s129 = sphi 0, %s129
      %s131 = sphi 0, %s129
      %s132 = sphi 0, %s131
      %s146 = sphi 0, %s132
      %s154 = sphi 0, %s156
      %s157 = sphi 0, %s154
      %s158 = sphi 0, %s157
      %s174 = sphi 0, %s158
    $region4: #{tpu_custom_call.1} parent=1 // loop_header_branch
      %21 = sbr.rel (%p19) target = $region8
    $region5: #{tpu_custom_call.1} parent=1 // loop_body
      %s23 = ssub.s32 %s18, 1
      %s24 = ssub.s32 %s18, 2
      %s31 = sadd.s32 1, %s26
      %p32 = scmp.ge.s32.totalorder %s31, 2
      %s33 = scalar_select %p32, 0, %s31
      %s34 = sadd.s32 1, %s25
      %s35 = scalar_select %p32, %s34, %s25
      %p36 = scmp.ge.s32.totalorder %s35, 2
      %s37 = scalar_select %p36, 0, %s35
      %s38 = ssub.s32 %s25, %s37
      %s39 = ssub.s32 %s26, %s33
      %s40 = sor.u32 %s38, %s39
      %p41 = scmp.eq.s32.totalorder %s40, 0
      %s43 = sadd.s32 %s42, 1
      %s44 = scalar_select %p41, %s42, %s43
      %p47 = pneg %p41
      %p48 = scmp.eq.s32.totalorder %s18, 3
      %p49 = por %p47, %p48
      %p50 = scmp.ne.s32.totalorder %s42, %s45
      %p51 = scmp.eq.s32.totalorder %s18, 0
      %p52 = por %p50, %p51
      %p53 = scmp.ne.s32.totalorder %s42, %s45
      %p54 = scmp.eq.s32.totalorder %s23, 3
      %p55 = por %p53, %p54
      %p56 = scmp.ne.s32.totalorder %s45, %s46
      %p57 = scmp.eq.s32.totalorder %s23, 0
      %p58 = por %p56, %p57
      %p59 = scmp.ne.s32.totalorder %s45, %s46
      %p60 = scmp.eq.s32.totalorder %s24, 3
      %p61 = por %p59, %p60
      %p63 = scmp.ne.s32.totalorder %s46, %s62
      %p64 = scmp.eq.s32.totalorder %s24, 0
      %p65 = por %p63, %p64
      %s67 = sadd.s32 %s66, 1
      %p70 = scmp.eq.s32.totalorder %s18, 3
      %p71 = scmp.ne.s32.totalorder %s66, %s68
      %p72 = scmp.eq.s32.totalorder %s18, 0
      %p73 = por %p71, %p72
      %p74 = scmp.ne.s32.totalorder %s66, %s68
      %p75 = scmp.eq.s32.totalorder %s23, 3
      %p76 = por %p74, %p75
      %p77 = scmp.ne.s32.totalorder %s68, %s69
      %p78 = scmp.eq.s32.totalorder %s23, 0
      %p79 = por %p77, %p78
      %p80 = scmp.ne.s32.totalorder %s68, %s69
      %p81 = scmp.eq.s32.totalorder %s24, 3
      %p82 = por %p80, %p81
      %p84 = scmp.ne.s32.totalorder %s69, %s83
      %p85 = scmp.eq.s32.totalorder %s24, 0
      %p86 = por %p84, %p85
      %s88 = sadd.s32 %s87, 1
      %p91 = scmp.eq.s32.totalorder %s18, 3
      %p92 = scmp.ne.s32.totalorder %s87, %s89
      %p93 = scmp.eq.s32.totalorder %s18, 0
      %p94 = por %p92, %p93
      %p95 = scmp.ne.s32.totalorder %s87, %s89
      %p96 = scmp.eq.s32.totalorder %s23, 3
      %p97 = por %p95, %p96
      %p98 = scmp.ne.s32.totalorder %s89, %s90
      %p99 = scmp.eq.s32.totalorder %s23, 0
      %p100 = por %p98, %p99
      %p101 = scmp.ne.s32.totalorder %s89, %s90
      %p102 = scmp.eq.s32.totalorder %s24, 3
      %p103 = por %p101, %p102
      %p105 = scmp.ne.s32.totalorder %s90, %s104
      %p106 = scmp.eq.s32.totalorder %s24, 0
      %p107 = por %p105, %p106
      %s109 = sadd.s32 %s108, 1
      %p112 = scmp.eq.s32.totalorder %s18, 3
      %p113 = scmp.ne.s32.totalorder %s108, %s110
      %p114 = scmp.eq.s32.totalorder %s18, 0
      %p115 = por %p113, %p114
      %p116 = scmp.ne.s32.totalorder %s108, %s110
      %p117 = scmp.eq.s32.totalorder %s23, 3
      %p118 = por %p116, %p117
      %p119 = scmp.ne.s32.totalorder %s110, %s111
      %p120 = scmp.eq.s32.totalorder %s23, 0
      %p121 = por %p119, %p120
      %p122 = scmp.ne.s32.totalorder %s110, %s111
      %p123 = scmp.eq.s32.totalorder %s24, 3
      %p124 = por %p122, %p123
      %p126 = scmp.ne.s32.totalorder %s111, %s125
      %p127 = scmp.eq.s32.totalorder %s24, 0
      %p128 = por %p126, %p127
      %s130 = sadd.s32 %s129, 1
      %p133 = scmp.eq.s32.totalorder %s18, 3
      %p134 = scmp.ne.s32.totalorder %s129, %s131
      %p135 = scmp.eq.s32.totalorder %s18, 0
      %p136 = por %p134, %p135
      %p137 = scmp.ne.s32.totalorder %s129, %s131
      %p138 = scmp.eq.s32.totalorder %s23, 3
      %p139 = por %p137, %p138
      %p140 = scmp.ne.s32.totalorder %s131, %s132
      %p141 = scmp.eq.s32.totalorder %s23, 0
      %p142 = por %p140, %p141
      %p143 = scmp.ne.s32.totalorder %s131, %s132
      %p144 = scmp.eq.s32.totalorder %s24, 3
      %p145 = por %p143, %p144
      %p147 = scmp.ne.s32.totalorder %s132, %s146
      %p148 = scmp.eq.s32.totalorder %s24, 0
      %p149 = por %p147, %p148
      %s150 = ssub.s32 %s25, %s37
      %s151 = ssub.s32 %s26, %s33
      %s152 = sor.u32 %s150, %s151
      %p153 = scmp.eq.s32.totalorder %s152, 0
      %s155 = sadd.s32 %s154, 1
      %s156 = scalar_select %p153, %s154, %s155
      %p159 = pneg %p153
      %p160 = scmp.eq.s32.totalorder %s18, 3
      %p161 = por %p159, %p160
      %p162 = scmp.ne.s32.totalorder %s154, %s157
      %p163 = scmp.eq.s32.totalorder %s18, 0
      %p164 = por %p162, %p163
      %p165 = scmp.ne.s32.totalorder %s154, %s157
      %p166 = scmp.eq.s32.totalorder %s23, 3
      %p167 = por %p165, %p166
      %p168 = scmp.ne.s32.totalorder %s157, %s158
      %p169 = scmp.eq.s32.totalorder %s23, 0
      %p170 = por %p168, %p169
      %p171 = scmp.ne.s32.totalorder %s157, %s158
      %p172 = scmp.eq.s32.totalorder %s24, 3
      %p173 = por %p171, %p172
      %p175 = scmp.ne.s32.totalorder %s158, %s174
      %p176 = scmp.eq.s32.totalorder %s24, 0
      %p177 = por %p175, %p176
      %p178 = scmp.le.s32.totalorder 1, %s18
      %p179 = scmp.lt.s32.totalorder %s18, 5
      %p180 = pnand %p178, %p179
      %p181 = pneg %p180
      // Predicated region
      $region9: #{tpu_custom_call.1} parent=5 // pred_check
        _
      $region10: #{tpu_custom_call.1} parent=5 // pred_check_branch
        %183 = sbr.rel (%p180) target = $region12
      $region11: #{tpu_custom_call.1} parent=5 // pred_region
        %s184 = ssub.s32 %s18, 1
        // Predicated region
        $region13: #{tpu_custom_call.1} parent=11 // pred_check
          %p185 = pneg %p79
        $region14: #{tpu_custom_call.1} parent=11 // pred_check_branch
          %187 = sbr.rel (%p185) target = $region16
        $region15: #{tpu_custom_call.1} parent=11 // pred_region
          %s189 = ssub.s32 768, 768
          %190 = vsyncadd [#allocation6], %s189
          %s191 = sshll.u32 [#allocation5], 4
          %s192 = int_to_ptr.vmem [resolvable:$true] %s191
          %197 = dma.hbm_to_vmem [thread:$0]  %s1, 768, %s192, [#allocation6], 192, 192, 12
        $region16: #{tpu_custom_call.1} parent=11 // pred_fallthru
          _
        // Predicated region
        $region17: #{tpu_custom_call.1} parent=11 // pred_check
          %p198 = pneg %p100
        $region18: #{tpu_custom_call.1} parent=11 // pred_check_branch
          %200 = sbr.rel (%p198) target = $region20
        $region19: #{tpu_custom_call.1} parent=11 // pred_region
          _
        $region20: #{tpu_custom_call.1} parent=11 // pred_fallthru
          _
        // Predicated region
        $region21: #{tpu_custom_call.1} parent=11 // pred_check
          %p201 = pneg %p121
        $region22: #{tpu_custom_call.1} parent=11 // pred_check_branch
          %203 = sbr.rel (%p201) target = $region24
        $region23: #{tpu_custom_call.1} parent=11 // pred_region
          _
        $region24: #{tpu_custom_call.1} parent=11 // pred_fallthru
          _
        // Predicated region
        $region25: #{tpu_custom_call.1} parent=11 // pred_check
          %p204 = pneg %p142
        $region26: #{tpu_custom_call.1} parent=11 // pred_check_branch
          %206 = sbr.rel (%p204) target = $region28
        $region27: #{tpu_custom_call.1} parent=11 // pred_region
          _
        $region28: #{tpu_custom_call.1} parent=11 // pred_fallthru
          _
      $region12: #{tpu_custom_call.1} parent=5 // pred_fallthru
        _
      %p207 = scmp.lt.s32.totalorder %s18, 4
      // Predicated region
      $region29: #{tpu_custom_call.1} parent=5 // pred_check
        %p208 = pneg %p207
      $region30: #{tpu_custom_call.1} parent=5 // pred_check_branch
        %210 = sbr.rel (%p208) target = $region32
      $region31: #{tpu_custom_call.1} parent=5 // pred_region
        // Predicated region
        $region33: #{tpu_custom_call.1} parent=31 // pred_check
          %p211 = pneg %p52
        $region34: #{tpu_custom_call.1} parent=31 // pred_check_branch
          %213 = sbr.rel (%p211) target = $region36
        $region35: #{tpu_custom_call.1} parent=31 // pred_region
          %s214 = sand.u32 %s42, 1
          %s215 = scalar_lea.sflag [#allocation3], %s214
          %s216 = sand.u32 %s42, 1
          %s217 = smul.addr %s216, 144
          %s218 = scalar_lea.vmem [#allocation2], %s217
          %s220 = ssub.s32 2304, 2304
          %221 = vsyncadd %s215, %s220
          %s222 = smul.addr %s25, 72
          %s223 = sadd.s32 %s26, %s222
          %s224 = smul.addr %s223, 64
          %s225 = scalar_lea.hbm %s0, %s224
          %s226 = sshll.u32 %s218, 4
          %s227 = int_to_ptr.vmem [resolvable:$true] %s226
          %232 = dma.hbm_to_vmem [thread:$0]  %s225, 2304, %s227, %s215, 128, 64, 4
        $region36: #{tpu_custom_call.1} parent=31 // pred_fallthru
          _
      $region32: #{tpu_custom_call.1} parent=5 // pred_fallthru
        _
      %p233 = scmp.le.s32.totalorder 1, %s18
      %p234 = scmp.lt.s32.totalorder %s18, 5
      %p235 = pnand %p233, %p234
      %p236 = pneg %p235
      // Predicated region
      $region37: #{tpu_custom_call.1} parent=5 // pred_check
        _
      $region38: #{tpu_custom_call.1} parent=5 // pred_check_branch
        %238 = sbr.rel (%p235) target = $region40
      $region39: #{tpu_custom_call.1} parent=5 // pred_region
        %s239 = ssub.s32 %s18, 1
        %s240 = sand.u32 %s45, 1
        %s241 = scalar_lea.sflag [#allocation3], %s240
        %s242 = sand.u32 %s45, 1
        %s243 = smul.addr %s242, 144
        %s244 = scalar_lea.vmem [#allocation2], %s243
        // Predicated region
        $region41: #{tpu_custom_call.1} parent=39 // pred_check
          %p245 = pneg %p58
        $region42: #{tpu_custom_call.1} parent=39 // pred_check_branch
          %247 = sbr.rel (%p245) target = $region44
        $region43: #{tpu_custom_call.1} parent=39 // pred_region
          %248 = dma.done %s241, 2304
        $region44: #{tpu_custom_call.1} parent=39 // pred_fallthru
          _
        // Predicated region
        $region45: #{tpu_custom_call.1} parent=39 // pred_check
          %p249 = pneg %p79
        $region46: #{tpu_custom_call.1} parent=39 // pred_check_branch
          %251 = sbr.rel (%p249) target = $region48
        $region47: #{tpu_custom_call.1} parent=39 // pred_region
          %252 = dma.done [#allocation6], 768
        $region48: #{tpu_custom_call.1} parent=39 // pred_fallthru
          _
        %s253 = sand.u32 %s45, 1
        %s254 = scalar_lea.sflag [#allocation3], %s253
        %s255 = sand.u32 %s45, 1
        %s256 = smul.addr %s255, 144
        %s257 = scalar_lea.vmem [#allocation2], %s256
        %p258 = pneg %p58
        %p259 = pneg %p55
        %p260 = pneg %p79
        %p261 = pneg %p76
        %p262 = pneg %p100
        %p263 = pneg %p97
        %p264 = pneg %p121
        %p265 = pneg %p118
        %p266 = pneg %p142
        %p267 = pneg %p139
        %p268 = pneg %p170
        %p269 = pneg %p167
        %s270 = sand.u32 %s157, 1
        %s271 = scalar_lea.sflag [#allocation4], %s270
        %s272 = sand.u32 %s157, 1
        %s273 = smul.addr %s272, 4
        %s274 = scalar_lea.vmem [#allocation7], %s273
        %v276 = vld [vmem:[#allocation5] sm:$0xff]
        %v277 = vld [vmem:[#allocation5 + $0x8] sm:$0xf]
        %v278 = vld [vmem:[#allocation5 + $0xc] sm:$0xff]
        %v279 = vld [vmem:[#allocation5 + $0x14] sm:$0xf]
        %v280 = vld [vmem:[#allocation5 + $0x18] sm:$0xff]
        %v281 = vld [vmem:[#allocation5 + $0x20] sm:$0xf]
        %v282 = vld [vmem:[#allocation5 + $0x24] sm:$0xff]
        %v283 = vld [vmem:[#allocation5 + $0x2c] sm:$0xf]
        %v284 = vld [vmem:[%s244] sm:$0xf]
        %v285 = vld [vmem:[%s244 + $0x4] sm:$0xf]
        %v286 = vld [vmem:[%s244 + $0x8] sm:$0xf]
        %v287 = vld [vmem:[%s244 + $0xc] sm:$0xf]
        %v288 = vld [vmem:[%s244 + $0x10] sm:$0xf]
        %v289 = vld [vmem:[%s244 + $0x14] sm:$0xf]
        %v290 = vld [vmem:[%s244 + $0x18] sm:$0xf]
        %v291 = vld [vmem:[%s244 + $0x1c] sm:$0xf]
        %v292 = vld [vmem:[%s244 + $0x20] sm:$0xf]
        %v293 = vld [vmem:[%s244 + $0x24] sm:$0xf]
        %v294 = vld [vmem:[%s244 + $0x28] sm:$0xf]
        %v295 = vld [vmem:[%s244 + $0x2c] sm:$0xf]
        %v296 = vld [vmem:[%s244 + $0x30] sm:$0xf]
        %v297 = vld [vmem:[%s244 + $0x34] sm:$0xf]
        %v298 = vld [vmem:[%s244 + $0x38] sm:$0xf]
        %v299 = vld [vmem:[%s244 + $0x3c] sm:$0xf]
        %v300 = vld [vmem:[%s244 + $0x40] sm:$0xf]
        %v301 = vld [vmem:[%s244 + $0x44] sm:$0xf]
        %v302 = vld [vmem:[%s244 + $0x48] sm:$0xf]
        %v303 = vld [vmem:[%s244 + $0x4c] sm:$0xf]
        %v304 = vld [vmem:[%s244 + $0x50] sm:$0xf]
        %v305 = vld [vmem:[%s244 + $0x54] sm:$0xf]
        %v306 = vld [vmem:[%s244 + $0x58] sm:$0xf]
        %v307 = vld [vmem:[%s244 + $0x5c] sm:$0xf]
        %v308 = vld [vmem:[%s244 + $0x60] sm:$0xf]
        %v309 = vld [vmem:[%s244 + $0x64] sm:$0xf]
        %v310 = vld [vmem:[%s244 + $0x68] sm:$0xf]
        %v311 = vld [vmem:[%s244 + $0x6c] sm:$0xf]
        %v312 = vld [vmem:[%s244 + $0x70] sm:$0xf]
        %v313 = vld [vmem:[%s244 + $0x74] sm:$0xf]
        %v314 = vld [vmem:[%s244 + $0x78] sm:$0xf]
        %v315 = vld [vmem:[%s244 + $0x7c] sm:$0xf]
        %v316 = vld [vmem:[%s244 + $0x80] sm:$0xf]
        %v317 = vld [vmem:[%s244 + $0x84] sm:$0xf]
        %v318 = vld [vmem:[%s244 + $0x88] sm:$0xf]
        %v319 = vld [vmem:[%s244 + $0x8c] sm:$0xf]
        %v320 = vld [vmem:[%s2] sm:$0xff]
        %v321 = vld [vmem:[%s2 + $0x8] sm:$0xff]
        %v322 = vld [vmem:[%s2 + $0x10] sm:$0xff]
        %v323 = vld [vmem:[%s2 + $0x18] sm:$0xff]
        %325 = vset.pattern.permute.xlu0 0
        %326 = vperm.xlu0 %325, %v320
        %v327 = vpop.permute.xlu0 %326
        %330 = vset.pattern.permute.xlu0 0
        %331 = vperm.xlu0 %330, %v321
        %v332 = vpop.permute.xlu0 %331
        %335 = vset.pattern.permute.xlu0 0
        %336 = vperm.xlu0 %335, %v322
        %v337 = vpop.permute.xlu0 %336
        %340 = vset.pattern.permute.xlu0 0
        %341 = vperm.xlu0 %340, %v323
        %v342 = vpop.permute.xlu0 %341
        %v352 = vunpack.c.l.b16 %v276
        %v353 = vunpack.c.h.b16 %v276
        %v354 = vunpack.c.l.b16 %v277
        %v355 = vunpack.c.l.b16 %v278
        %v356 = vunpack.c.h.b16 %v278
        %v357 = vunpack.c.l.b16 %v279
        %v358 = vunpack.c.l.b16 %v280
        %v359 = vunpack.c.h.b16 %v280
        %v360 = vunpack.c.l.b16 %v281
        %v361 = vunpack.c.l.b16 %v282
        %v362 = vunpack.c.h.b16 %v282
        %v363 = vunpack.c.l.b16 %v283
        %v364 = vpack.c.b16 %v355, %v352
        %v365 = vpack.c.b16 %v356, %v353
        %v366 = vpack.c.b16 %v357, %v354
        %v367 = vpack.c.b16 %v361, %v358
        %v368 = vpack.c.b16 %v362, %v359
        %v369 = vpack.c.b16 %v363, %v360
        %v410 = vunpack.c.l.b16 %v284
        %v411 = vunpack.c.l.b16 %v285
        %v412 = vunpack.c.l.b16 %v286
        %v413 = vunpack.c.l.b16 %v287
        %v414 = vunpack.c.l.b16 %v288
        %v415 = vunpack.c.l.b16 %v289
        %v416 = vunpack.c.l.b16 %v290
        %v417 = vunpack.c.l.b16 %v291
        %v418 = vunpack.c.l.b16 %v292
        %v419 = vunpack.c.l.b16 %v293
        %v420 = vunpack.c.l.b16 %v294
        %v421 = vunpack.c.l.b16 %v295
        %v422 = vunpack.c.l.b16 %v296
        %v423 = vunpack.c.l.b16 %v297
        %v424 = vunpack.c.l.b16 %v298
        %v425 = vunpack.c.l.b16 %v299
        %v426 = vunpack.c.l.b16 %v300
        %v427 = vunpack.c.l.b16 %v301
        %v428 = vunpack.c.l.b16 %v302
        %v429 = vunpack.c.l.b16 %v303
        %v430 = vunpack.c.l.b16 %v304
        %v431 = vunpack.c.l.b16 %v305
        %v432 = vunpack.c.l.b16 %v306
        %v433 = vunpack.c.l.b16 %v307
        %v434 = vunpack.c.l.b16 %v308
        %v435 = vunpack.c.l.b16 %v309
        %v436 = vunpack.c.l.b16 %v310
        %v437 = vunpack.c.l.b16 %v311
        %v438 = vunpack.c.l.b16 %v312
        %v439 = vunpack.c.l.b16 %v313
        %v440 = vunpack.c.l.b16 %v314
        %v441 = vunpack.c.l.b16 %v315
        %v442 = vunpack.c.l.b16 %v316
        %v443 = vunpack.c.l.b16 %v317
        %v444 = vunpack.c.l.b16 %v318
        %v445 = vunpack.c.l.b16 %v319
        %v446 = vpack.c.b16 %v411, %v410
        %v447 = vpack.c.b16 %v413, %v412
        %v448 = vpack.c.b16 %v415, %v414
        %v449 = vpack.c.b16 %v417, %v416
        %v450 = vpack.c.b16 %v419, %v418
        %v451 = vpack.c.b16 %v421, %v420
        %v452 = vpack.c.b16 %v423, %v422
        %v453 = vpack.c.b16 %v425, %v424
        %v454 = vpack.c.b16 %v427, %v426
        %v455 = vpack.c.b16 %v429, %v428
        %v456 = vpack.c.b16 %v431, %v430
        %v457 = vpack.c.b16 %v433, %v432
        %v458 = vpack.c.b16 %v435, %v434
        %v459 = vpack.c.b16 %v437, %v436
        %v460 = vpack.c.b16 %v439, %v438
        %v461 = vpack.c.b16 %v441, %v440
        %v462 = vpack.c.b16 %v443, %v442
        %v463 = vpack.c.b16 %v445, %v444
        %vm482 = vcmask 261120
        %v484 = vsel %vm482, %v366, 0
        %v487 = vsel %vm482, %v369, 0
        %489 = vmatprep.subr.bf16.mxu0 0
        %490 = vmatpush1.bf16.msra.mxu0 %v446
        %491 = vmatprep.subr.bf16.mxu0 0
        %492 = vmatpush1.bf16.msra.mxu0 %v447
        %493 = vmatprep.subr.bf16.mxu0 0
        %494 = vmatpush1.bf16.msra.mxu0 %v448
        %495 = vmatprep.subr.bf16.mxu0 0
        %496 = vmatpush1.bf16.msra.mxu0 %v449
        %497 = vmatprep.subr.bf16.mxu0 0
        %498 = vmatpush1.bf16.msra.mxu0 %v450
        %499 = vmatprep.subr.bf16.mxu0 0
        %500 = vmatpush1.bf16.msra.mxu0 %v451
        %501 = vmatprep.subr.bf16.mxu0 0
        %502 = vmatpush1.bf16.msra.mxu0 %v452
        %503 = vmatprep.subr.bf16.mxu0 0
        %504 = vmatpush1.bf16.msra.mxu0 %v453
        %505 = vmatprep.subr.bf16.mxu0 0
        %506 = vmatpush1.bf16.msra.mxu0 %v454
        %507 = vmatprep.subr.bf16.mxu0 0
        %508 = vmatpush1.bf16.msra.mxu0 %v455
        %509 = vmatprep.subr.bf16.mxu0 0
        %510 = vmatpush1.bf16.msra.mxu0 %v456
        %511 = vmatprep.subr.bf16.mxu0 0
        %512 = vmatpush1.bf16.msra.mxu0 %v457
        %513 = vmatprep.subr.bf16.mxu0 0
        %514 = vmatpush1.bf16.msra.mxu0 %v458
        %515 = vmatprep.subr.bf16.mxu0 0
        %516 = vmatpush1.bf16.msra.mxu0 %v459
        %517 = vmatprep.subr.bf16.mxu0 0
        %518 = vmatpush1.bf16.msra.mxu0 %v460
        %519 = vmatprep.subr.bf16.mxu0 0
        %520 = vmatpush1.bf16.msra.mxu0 %v461
        %521 = vmatprep.mubr.bf16.mxu0 %v365
        %522 = vmatmul.mubr.bf16.gmra.mrb[0].mxu0 %v364
        %v523 = vpop.f32.mrb[0].mxu0
        %v524 = vadd.f32 %v327, %v523
        %v525 = vpop.f32.mrb[0].mxu0
        %v526 = vpop.f32.mrb[0].mxu0
        %v527 = vadd.f32 %v332, %v526
        %v528 = vpop.f32.mrb[0].mxu0
        %529 = vmatprep.mubr.bf16.mxu0 %v368
        %530 = vmatmul.mubr.bf16.gmra.mrb[0].mxu0 %v367
        %v531 = vpop.f32.mrb[0].mxu0
        %v532 = vadd.f32 %v337, %v531
        %v533 = vpop.f32.mrb[0].mxu0
        %v534 = vpop.f32.mrb[0].mxu0
        %v535 = vadd.f32 %v342, %v534
        %v536 = vpop.f32.mrb[0].mxu0
        %537 = vdwg.mxu0
        %538 = vmatprep.subr.bf16.mxu0 0
        %539 = vmatpush1.bf16.msra.mxu0 %v462
        %540 = vmatprep.subr.bf16.mxu0 0
        %541 = vmatpush1.bf16.msra.mxu0 %v463
        %542 = vmatprep.subr.bf16.mxu0 0
        %543 = vmatpush1.bf16.msra.mxu0 0
        %544 = vmatprep.subr.bf16.mxu0 0
        %545 = vmatpush1.bf16.msra.mxu0 0
        %546 = vmatprep.subr.bf16.mxu0 0
        %547 = vmatpush1.bf16.msra.mxu0 0
        %548 = vmatprep.subr.bf16.mxu0 0
        %549 = vmatpush1.bf16.msra.mxu0 0
        %550 = vmatprep.subr.bf16.mxu0 0
        %551 = vmatpush1.bf16.msra.mxu0 0
        %552 = vmatprep.subr.bf16.mxu0 0
        %553 = vmatpush1.bf16.msra.mxu0 0
        %554 = vmatprep.subr.bf16.mxu0 0
        %555 = vmatpush1.bf16.msra.mxu0 0
        %556 = vmatprep.subr.bf16.mxu0 0
        %557 = vmatpush1.bf16.msra.mxu0 0
        %558 = vmatprep.subr.bf16.mxu0 0
        %559 = vmatpush1.bf16.msra.mxu0 0
        %560 = vmatprep.subr.bf16.mxu0 0
        %561 = vmatpush1.bf16.msra.mxu0 0
        %562 = vmatprep.subr.bf16.mxu0 0
        %563 = vmatpush1.bf16.msra.mxu0 0
        %564 = vmatprep.subr.bf16.mxu0 0
        %565 = vmatpush1.bf16.msra.mxu0 0
        %566 = vmatprep.subr.bf16.mxu0 0
        %567 = vmatpush1.bf16.msra.mxu0 0
        %568 = vmatprep.subr.bf16.mxu0 0
        %569 = vmatpush1.bf16.msra.mxu0 0
        %570 = vmatprep.mubr.bf16.mxu0 0
        %571 = vmatmul.mubr.bf16.gmra.mrb[0].mxu0 %v484
        %v572 = vpop.f32.mrb[0].mxu0
        %v573 = vadd.f32 %v524, %v572
        %v574 = vpop.f32.mrb[0].mxu0
        %v575 = vpop.f32.mrb[0].mxu0
        %v576 = vadd.f32 %v527, %v575
        %v577 = vpop.f32.mrb[0].mxu0
        %578 = vmatprep.mubr.bf16.mxu0 0
        %579 = vmatmul.mubr.bf16.gmra.mrb[0].mxu0 %v487
        %v580 = vpop.f32.mrb[0].mxu0
        %v581 = vadd.f32 %v532, %v580
        %v582 = vpop.f32.mrb[0].mxu0
        %v583 = vpop.f32.mrb[0].mxu0
        %v584 = vadd.f32 %v535, %v583
        %v585 = vpop.f32.mrb[0].mxu0
        %586 = vdwg.mxu0
        %v587 = vmax.f32 %v573, 0.0
        %v588 = vmax.f32 %v576, 0.0
        %v589 = vmax.f32 %v581, 0.0
        %v590 = vmax.f32 %v584, 0.0
        %v591 = vld [vmem:[%s3] sm:$0x3]
        %v592 = vpack.c.bf16 %v588, %v587
        %v593 = vpack.c.bf16 %v590, %v589
        %v594 = vld [vmem:[%s4] sm:$0xf]
        %596 = vset.pattern.permute.xlu0 0
        %597 = vperm.xlu0 %596, %v594
        %v598 = vpop.permute.xlu0 %597
        %v601 = vsel %vm482, %v591, 0
        %603 = vmatprep.subr.bf16.mxu0 0
        %604 = vmatpush1.bf16.msra.mxu0 %v592
        %605 = vmatprep.subr.bf16.mxu0 0
        %606 = vmatpush1.bf16.msra.mxu0 %v593
        %607 = vmatprep.subr.bf16.mxu0 0
        %608 = vmatpush1.bf16.msra.mxu0 0
        %609 = vmatprep.subr.bf16.mxu0 0
        %610 = vmatpush1.bf16.msra.mxu0 0
        %611 = vmatprep.subr.bf16.mxu0 0
        %612 = vmatpush1.bf16.msra.mxu0 0
        %613 = vmatprep.subr.bf16.mxu0 0
        %614 = vmatpush1.bf16.msra.mxu0 0
        %615 = vmatprep.subr.bf16.mxu0 0
        %616 = vmatpush1.bf16.msra.mxu0 0
        %617 = vmatprep.subr.bf16.mxu0 0
        %618 = vmatpush1.bf16.msra.mxu0 0
        %619 = vmatprep.subr.bf16.mxu0 0
        %620 = vmatpush1.bf16.msra.mxu0 0
        %621 = vmatprep.subr.bf16.mxu0 0
        %622 = vmatpush1.bf16.msra.mxu0 0
        %623 = vmatprep.subr.bf16.mxu0 0
        %624 = vmatpush1.bf16.msra.mxu0 0
        %625 = vmatprep.subr.bf16.mxu0 0
        %626 = vmatpush1.bf16.msra.mxu0 0
        %627 = vmatprep.subr.bf16.mxu0 0
        %628 = vmatpush1.bf16.msra.mxu0 0
        %629 = vmatprep.subr.bf16.mxu0 0
        %630 = vmatpush1.bf16.msra.mxu0 0
        %631 = vmatprep.subr.bf16.mxu0 0
        %632 = vmatpush1.bf16.msra.mxu0 0
        %633 = vmatprep.subr.bf16.mxu0 0
        %634 = vmatpush1.bf16.msra.mxu0 0
        %635 = vmatprep.mubr.bf16.mxu0 0
        %636 = vmatmul.mubr.bf16.gmra.mrb[0].mxu0 %v601
        %v637 = vpop.f32.mrb[0].mxu0
        %v638 = vadd.f32 %v598, %v637
        %v639 = vpop.f32.mrb[0].mxu0
        %v640 = vpop.f32.mrb[0].mxu0
        %v641 = vpop.f32.mrb[0].mxu0
        %642 = vdwg.mxu0
        %643 = vst [vmem:[%s274] sm:$0xf] %v638
        %s644 = sand.u32 %s157, 1
        %s645 = scalar_lea.sflag [#allocation4], %s644
        %s646 = sand.u32 %s157, 1
        %s647 = smul.addr %s646, 4
        %s648 = scalar_lea.vmem [#allocation7], %s647
        // Predicated region
        $region49: #{tpu_custom_call.1} parent=39 // pred_check
          %p649 = pneg %p167
        $region50: #{tpu_custom_call.1} parent=39 // pred_check_branch
          %651 = sbr.rel (%p649) target = $region52
        $region51: #{tpu_custom_call.1} parent=39 // pred_region
          %s653 = ssub.s32 64, 64
          %654 = vsyncadd %s645, %s653
          %s655 = smul.addr %s27, 2
          %s656 = sadd.s32 %s28, %s655
          %s657 = smul.addr %s656, 64
          %s658 = scalar_lea.hbm %s5, %s657
          %s660 = sshll.u32 %s648, 4
          %s661 = int_to_ptr.vmem [resolvable:$true] %s660
          %663 = dma.vmem_to_hbm [thread:$0]  %s661, 64, %s658, %s645
        $region52: #{tpu_custom_call.1} parent=39 // pred_fallthru
          _
      $region40: #{tpu_custom_call.1} parent=5 // pred_fallthru
        _
      %p664 = scmp.le.s32.totalorder 2, %s18
      // Predicated region
      $region53: #{tpu_custom_call.1} parent=5 // pred_check
        %p665 = pneg %p664
      $region54: #{tpu_custom_call.1} parent=5 // pred_check_branch
        %667 = sbr.rel (%p665) target = $region56
      $region55: #{tpu_custom_call.1} parent=5 // pred_region
        %s668 = ssub.s32 %s18, 2
        // Predicated region
        $region57: #{tpu_custom_call.1} parent=55 // pred_check
          %p669 = pneg %p173
        $region58: #{tpu_custom_call.1} parent=55 // pred_check_branch
          %671 = sbr.rel (%p669) target = $region60
        $region59: #{tpu_custom_call.1} parent=55 // pred_region
          %s672 = sand.u32 %s158, 1
          %s673 = scalar_lea.sflag [#allocation4], %s672
          %s674 = sand.u32 %s158, 1
          %s675 = smul.addr %s674, 4
          %s676 = scalar_lea.vmem [#allocation7], %s675
          %677 = dma.done %s673, 64
        $region60: #{tpu_custom_call.1} parent=55 // pred_fallthru
          _
      $region56: #{tpu_custom_call.1} parent=5 // pred_fallthru
        _
    $region6: #{tpu_custom_call.1} parent=1 // loop_footer
      %s22 = sadd.s32 1, %s18
    $region7: #{tpu_custom_call.1} parent=1 // loop_footer_branch
      %17 = sbr.rel target = $region3
    $region8: #{tpu_custom_call.1} parent=1 // loop_exit
      _
    %678 = vsyncpa [#allocation3], 1
    %s679 = scalar_lea.sflag [#allocation3], 1
    %680 = vsyncpa %s679, 1
    %681 = vsyncpa [#allocation6], 1
    %682 = vsyncpa [#allocation4], 1
    %s683 = scalar_lea.sflag [#allocation4], 1
    %684 = vsyncpa %s683, 1

</llo_original>
